<compile_context>
chip_gen: v5e
topology: v5e:2x2
jax: 0.10.0
libtpu: 0.0.40
codegen_flags: <defaults>
</compile_context>

<pallas_src>
import jax
import jax.numpy as jnp
from jax import lax
from jax.experimental import pallas as pl
from jax.experimental.pallas import tpu as pltpu


def _pyramid_pool_kernel(x_ref, s_ref, w_ref, b_ref, o_ref, acc_ref):
    # x_ref:   [1, ci_tile, H*W]     native-NCHW slab for one batch / C_in tile
    # s_ref:   [H*W, P*P]            pooling matrix (1/window_area weights)
    # w_ref:   [ci_tile, C_out_pad]  conv weight with BN scale folded in
    # b_ref:   [1, C_out_pad]        folded BN bias
    # o_ref:   [1, P*P, C_out_pad]   channels-last, lane-dense output
    # acc_ref: [P*P, C_out_pad]      f32 accumulator across C_in tiles
    ci = pl.program_id(1)

    @pl.when(ci == 0)
    def _init():
        acc_ref[...] = jnp.zeros_like(acc_ref)

    # AdaptiveAvgPool2d as an MXU matmul: [ci_tile, HW] @ [HW, PP] -> [ci_tile, PP]
    pooled = jnp.dot(x_ref[0], s_ref[...], preferred_element_type=jnp.float32)
    pooled = pooled.astype(w_ref.dtype)

    # 1x1 conv (BN scale already folded into w): contract the C_in tile.
    # dimension_numbers = trans_a matmul: [ci_tile, PP]^T @ [ci_tile, C_out_pad]
    acc_ref[...] += lax.dot_general(
        pooled, w_ref[...],
        dimension_numbers=(((0,), (0,)), ((), ())),
        preferred_element_type=jnp.float32)                     # [PP, C_out_pad]

    @pl.when(ci == pl.num_programs(1) - 1)
    def _finalize():
        y = acc_ref[...] + b_ref[...]                           # BN bias
        o_ref[0] = jnp.maximum(y, 0.0).astype(o_ref.dtype)      # ReLU


def _adaptive_pool_matrix_1d(in_size, out_size):
    """[in_size, out_size] matrix mapping pixels -> adaptive-pool outputs,
    column-normalised by the window length (matches AdaptiveAvgPool2d)."""
    i = jnp.arange(out_size)
    starts = (i * in_size) // out_size
    ends = ((i + 1) * in_size + out_size - 1) // out_size       # ceil
    idx = jnp.arange(in_size)
    member = (idx[:, None] >= starts[None, :]) & (idx[:, None] < ends[None, :])
    return member.astype(jnp.float32) / (ends - starts)[None, :].astype(jnp.float32)


def upernet_pyramid_pooling_block(x, conv_w, bn_gamma, bn_beta, bn_mean, bn_var,
                                  pool_scale, eps=1e-5, *,
                                  ci_tile=None, compute_dtype=jnp.float32):
    """x: [B, C_in, H, W] (NCHW, like PyTorch). Returns [B, C_out, P, P] (f32)."""
    B, C_in, H, W = x.shape
    P = int(pool_scale)
    PP = P * P
    HW = H * W
    C_out = conv_w.shape[0]
    C_out_pad = ((C_out + 127) // 128) * 128                    # lane-dense output

    if ci_tile is None:
        ci_tile = C_in if C_in <= 512 else 512                  # fits VMEM on v7x too
    assert C_in % ci_tile == 0, "ci_tile must divide C_in"
    n_ci = C_in // ci_tile

    # ---- glue: contiguous reshape only (no HBM transpose of x) -------------
    x_flat = x.reshape(B, C_in, HW).astype(compute_dtype)

    # ---- constants built once in the wrapper (weights only) ----------------
    sh = _adaptive_pool_matrix_1d(H, P)                         # [H, P]
    sw = _adaptive_pool_matrix_1d(W, P)                         # [W, P]
    pool_mat = (sh[:, None, :, None] * sw[None, :, None, :]).reshape(HW, PP)
    pool_mat = pool_mat.astype(compute_dtype)

    scale = bn_gamma / jnp.sqrt(bn_var + eps)                   # [C_out]
    w_fold = (conv_w.reshape(C_out, C_in) * scale[:, None]).T   # [C_in, C_out]
    w_fold = jnp.pad(w_fold, ((0, 0), (0, C_out_pad - C_out))).astype(compute_dtype)
    bias = bn_beta - bn_mean * scale                            # [C_out]
    bias = jnp.pad(bias, (0, C_out_pad - C_out)).reshape(1, C_out_pad)
    bias = bias.astype(jnp.float32)

    out_p = pl.pallas_call(
        _pyramid_pool_kernel,
        out_shape=jax.ShapeDtypeStruct((B, PP, C_out_pad), jnp.float32),
        grid=(B, n_ci),
        in_specs=[
            pl.BlockSpec((1, ci_tile, HW), lambda b, c: (b, c, 0)),
            pl.BlockSpec((HW, PP), lambda b, c: (0, 0)),
            pl.BlockSpec((ci_tile, C_out_pad), lambda b, c: (c, 0)),
            pl.BlockSpec((1, C_out_pad), lambda b, c: (0, 0)),
        ],
        out_specs=pl.BlockSpec((1, PP, C_out_pad), lambda b, c: (b, 0, 0)),
        scratch_shapes=[pltpu.VMEM((PP, C_out_pad), jnp.float32)],
        compiler_params=pltpu.CompilerParams(
            dimension_semantics=("parallel", "arbitrary")),
    )(x_flat, pool_mat, w_fold, bias)

    # ---- glue: slice off the lane padding, back to NCHW (tiny output) ------
    out = out_p[:, :, :C_out].reshape(B, P, P, C_out)
    return jnp.transpose(out, (0, 3, 1, 2))                     # [B, C_out, P, P]


def _reference(x, conv_w, bn_gamma, bn_beta, bn_mean, bn_var, pool_scale,
               eps=1e-5):
    B, C_in, H, W = x.shape
    P = pool_scale
    kh, kw = H // P, W // P
    pooled = x.reshape(B, C_in, P, kh, P, kw).mean(axis=(3, 5))     # [B,C,P,P]
    conv = jnp.einsum("oc,bcij->boij", conv_w.reshape(-1, C_in), pooled)
    scale = bn_gamma / jnp.sqrt(bn_var + eps)
    bn = conv * scale[None, :, None, None] + \
        (bn_beta - bn_mean * scale)[None, :, None, None]
    return jnp.maximum(bn, 0.0)


if __name__ == "__main__":
    # small shapes consistent with the module
    B, C_in, H, W = 2, 4, 16, 16
    pool_scale = 4
    channels = 32  # C_out

    key = jax.random.PRNGKey(0)
    k_x, k_w, k_g, k_b, k_m, k_v = jax.random.split(key, 6)

    x = jax.random.normal(k_x, (B, C_in, H, W), dtype=jnp.float32)

    # deterministic synthetic parameters (shapes from the module __init__)
    conv_w = jax.random.normal(k_w, (channels, C_in, 1, 1), jnp.float32) * 0.1
    bn_gamma = 1.0 + 0.1 * jax.random.normal(k_g, (channels,), jnp.float32)
    bn_beta = 0.1 * jax.random.normal(k_b, (channels,), jnp.float32)
    bn_mean = 0.1 * jax.random.normal(k_m, (channels,), jnp.float32)
    bn_var = jnp.abs(jax.random.normal(k_v, (channels,), jnp.float32)) + 0.5

    out = upernet_pyramid_pooling_block(
        x, conv_w, bn_gamma, bn_beta, bn_mean, bn_var, pool_scale)
    out = jax.block_until_ready(out)

    ref = _reference(x, conv_w, bn_gamma, bn_beta, bn_mean, bn_var, pool_scale)
    assert out.shape == (B, channels, pool_scale, pool_scale)
    # tolerance covers MXU f32 multi-pass vs XLA einsum rounding differences
    assert jnp.allclose(out, ref, atol=1e-4, rtol=1e-4), \
        float(jnp.max(jnp.abs(out - ref)))

    print("KERNEL_OK")
</pallas_src>

<mosaic_0001>
module attributes {stable_mosaic.version = 11 : i64} {
  func.func @_pyramid_pool_kernel(%arg0: i32, %arg1: i32, %arg2: memref<1x4x256xf32, #tpu.memory_space<vmem>>, %arg3: memref<256x16xf32, #tpu.memory_space<vmem>>, %arg4: memref<4x128xf32, #tpu.memory_space<vmem>>, %arg5: memref<1x128xf32, #tpu.memory_space<vmem>>, %arg6: memref<1x16x128xf32, #tpu.memory_space<vmem>>, %arg7: memref<16x128xf32, #tpu.memory_space<vmem>>) attributes {dimension_semantics = [#tpu.dimension_semantics<parallel>, #tpu.dimension_semantics<arbitrary>], iteration_bounds = array<i64: 2, 1>, scalar_prefetch = 0 : i64, scratch_operands = 1 : i64, tpu.core_type = #tpu.core_type<tc>, window_params = [{transform_indices = @transform_0, window_bounds = array<i64: 1, 4, 256>}, {pipeline_mode = #tpu.pipeline_mode<synchronous>, transform_indices = @transform_1, window_bounds = array<i64: 256, 16>}, {transform_indices = @transform_2, window_bounds = array<i64: 4, 128>}, {pipeline_mode = #tpu.pipeline_mode<synchronous>, transform_indices = @transform_3, window_bounds = array<i64: 1, 128>}, {transform_indices = @transform_4, window_bounds = array<i64: 1, 16, 128>}]} {
    %c0_i32 = arith.constant 0 : i32
    %0 = arith.cmpi eq, %arg1, %c0_i32 : i32
    %1 = arith.extui %0 : i1 to i32
    %c0_i32_0 = arith.constant 0 : i32
    %2 = arith.cmpi ne, %1, %c0_i32_0 : i32
    scf.if %2 {
      %cst_14 = arith.constant 0.000000e+00 : f32
      %15 = vector.broadcast %cst_14 : f32 to vector<16x128xf32>
      %c0_15 = arith.constant 0 : index
      %c0_16 = arith.constant 0 : index
      %16 = vector.load %arg7[%c0_15, %c0_16] : memref<16x128xf32, #tpu.memory_space<vmem>>, vector<16x128xf32>
      tpu.vector_store %arg7[%c0_15, %c0_16], %15 {strides = array<i32>} : memref<16x128xf32, #tpu.memory_space<vmem>>, vector<16x128xf32>,
    } else {
    }
    %c0 = arith.constant 0 : index
    %c0_1 = arith.constant 0 : index
    %c0_2 = arith.constant 0 : index
    %3 = vector.load %arg2[%c0, %c0_1, %c0_2] : memref<1x4x256xf32, #tpu.memory_space<vmem>>, vector<1x4x256xf32>
    %4 = vector.shape_cast %3 : vector<1x4x256xf32> to vector<4x256xf32>
    %c0_3 = arith.constant 0 : index
    %c0_4 = arith.constant 0 : index
    %5 = vector.load %arg3[%c0_3, %c0_4] : memref<256x16xf32, #tpu.memory_space<vmem>>, vector<256x16xf32>
    %cst = arith.constant dense<0.000000e+00> : vector<4x16xf32>
    %6 = tpu.matmul %4, %5, %cst {dimension_numbers = #tpu.dot_dimension_numbers<[1], [0], [0], [1], [0, 0, 1, 1], [], []>} : vector<4x256xf32>, vector<256x16xf32>, vector<4x16xf32> -> vector<4x16xf32>
    %c0_5 = arith.constant 0 : index
    %c0_6 = arith.constant 0 : index
    %7 = vector.load %arg7[%c0_5, %c0_6] : memref<16x128xf32, #tpu.memory_space<vmem>>, vector<16x128xf32>
    %c0_7 = arith.constant 0 : index
    %c0_8 = arith.constant 0 : index
    %8 = vector.load %arg4[%c0_7, %c0_8] : memref<4x128xf32, #tpu.memory_space<vmem>>, vector<4x128xf32>
    %cst_9 = arith.constant dense<0.000000e+00> : vector<16x128xf32>
    %9 = tpu.matmul %6, %8, %cst_9 {dimension_numbers = #tpu.dot_dimension_numbers<[0], [0], [1], [1], [0, 1, 1, 1], [], []>} : vector<4x16xf32>, vector<4x128xf32>, vector<16x128xf32> -> vector<16x128xf32>
    %10 = arith.addf %7, %9 : vector<16x128xf32>
    %c0_10 = arith.constant 0 : index
    %c0_11 = arith.constant 0 : index
    %11 = vector.load %arg7[%c0_10, %c0_11] : memref<16x128xf32, #tpu.memory_space<vmem>>, vector<16x128xf32>
    tpu.vector_store %arg7[%c0_10, %c0_11], %10 {strides = array<i32>} : memref<16x128xf32, #tpu.memory_space<vmem>>, vector<16x128xf32>,
    %c0_i32_12 = arith.constant 0 : i32
    %12 = arith.cmpi eq, %arg1, %c0_i32_12 : i32
    %13 = arith.extui %12 : i1 to i32
    %c0_i32_13 = arith.constant 0 : i32
    %14 = arith.cmpi ne, %13, %c0_i32_13 : i32
    scf.if %14 {
      %c0_14 = arith.constant 0 : index
      %c0_15 = arith.constant 0 : index
      %15 = vector.load %arg7[%c0_14, %c0_15] : memref<16x128xf32, #tpu.memory_space<vmem>>, vector<16x128xf32>
      %c0_16 = arith.constant 0 : index
      %c0_17 = arith.constant 0 : index
      %16 = vector.load %arg5[%c0_16, %c0_17] : memref<1x128xf32, #tpu.memory_space<vmem>>, vector<1x128xf32>
      %17 = vector.broadcast %16 : vector<1x128xf32> to vector<16x128xf32>
      %18 = arith.addf %15, %17 : vector<16x128xf32>
      %cst_18 = arith.constant 0.000000e+00 : f32
      %19 = vector.broadcast %cst_18 : f32 to vector<16x128xf32>
      %20 = arith.maximumf %18, %19 : vector<16x128xf32>
      %c0_19 = arith.constant 0 : index
      %c0_20 = arith.constant 0 : index
      %c0_21 = arith.constant 0 : index
      %21 = vector.load %arg6[%c0_19, %c0_20, %c0_21] : memref<1x16x128xf32, #tpu.memory_space<vmem>>, vector<1x16x128xf32>
      %22 = vector.shape_cast %21 : vector<1x16x128xf32> to vector<16x128xf32>
      %23 = vector.shape_cast %20 : vector<16x128xf32> to vector<1x16x128xf32>
      tpu.vector_store %arg6[%c0_19, %c0_20, %c0_21], %23 {strides = array<i32>} : memref<1x16x128xf32, #tpu.memory_space<vmem>>, vector<1x16x128xf32>,
    } else {
    }
    return
  }
  func.func @transform_0(%arg0: i32, %arg1: i32) -> (i32, i32, i32) {
    %c0_i32 = arith.constant 0 : i32
    %c0_i32_0 = arith.constant 0 : i32
    return %arg0, %arg1, %c0_i32 : i32, i32, i32
  }
  func.func @transform_1(%arg0: i32, %arg1: i32) -> (i32, i32) {
    %c0_i32 = arith.constant 0 : i32
    %c0_i32_0 = arith.constant 0 : i32
    %c0_i32_1 = arith.constant 0 : i32
    return %c0_i32, %c0_i32_0 : i32, i32
  }
  func.func @transform_2(%arg0: i32, %arg1: i32) -> (i32, i32) {
    %c0_i32 = arith.constant 0 : i32
    %c0_i32_0 = arith.constant 0 : i32
    return %arg1, %c0_i32 : i32, i32
  }
  func.func @transform_3(%arg0: i32, %arg1: i32) -> (i32, i32) {
    %c0_i32 = arith.constant 0 : i32
    %c0_i32_0 = arith.constant 0 : i32
    %c0_i32_1 = arith.constant 0 : i32
    return %c0_i32, %c0_i32_0 : i32, i32
  }
  func.func @transform_4(%arg0: i32, %arg1: i32) -> (i32, i32, i32) {
    %c0_i32 = arith.constant 0 : i32
    %c0_i32_0 = arith.constant 0 : i32
    %c0_i32_1 = arith.constant 0 : i32
    return %arg0, %c0_i32, %c0_i32_0 : i32, i32, i32
  }
}

</mosaic_0001>

<llo_original>
// kernel: tpu_custom_call.1
$region0: #{tpu_custom_call.1}
  #allocation0 [shape = 'u32[]', space=smem, size = 0x4, offset = 0x4, fixed_abs, tag = 'smem constant byte address 0x4 - core index']
  #allocation1 [shape = 'u32[72,128]{1,0:T(1,128)}', space=vmem, size = 0x9000, scoped, tag = 'internal scratch']
  #allocation2 [shape = 'f32[16,128]{1,0:T(8,128)}', space=vmem, size = 0x2000, scoped, tag = 'scratch operand']
  %s0 = inlined_call_operand.vmem [shape: f32[2,4,256], index: 0, kind: input, shape index: {}]
  %s1 = inlined_call_operand.vmem [shape: f32[256,16], index: 1, kind: input, shape index: {}]
  %s2 = inlined_call_operand.vmem [shape: f32[4,128], index: 2, kind: input, shape index: {}]
  %s3 = inlined_call_operand.vmem [shape: f32[1,128], index: 3, kind: input, shape index: {}]
  %s4 = inlined_call_operand.hbm [shape: f32[2,16,128], index: 4, kind: output, shape index: {}]
  %s5 = sld [smem:[#allocation0]]
  $region57: #{tpu_custom_call.1} parent=0
    _
  %s7 = ssub.s32 1, %s5
  %s8 = scalar_select 0, %s7, %s5
  $region1: #{tpu_custom_call.1} parent=0
    #allocation3 [shape = 'u8[16384]{0}', space=vmem, size = 0x4000, scoped, tag = 'output window, operand 0']
    #allocation4 [shape = 's32[2]{0}', space=sflag, size = 0x8, scoped, tag = 'scoped memory for tpu_custom_call.1']
    %9 = vsyncpa [#allocation4], 0
    %s10 = scalar_lea.sflag [#allocation4], 1
    %11 = vsyncpa %s10, 0
    loop: start=0, step=1, limit=4
    $region2: #{tpu_custom_call.1} parent=1 // loop_pre_header
      _
    $region3: #{tpu_custom_call.1} parent=1 // loop_header
      %s13 = sphi 0, %s17
      %p14 = scmp.ge.s32.totalorder %s13, 4
      %s20 = sphi 0, %s32
      %s21 = sphi 0, %s28
      %s22 = sphi 0, %s20
      %s23 = sphi 0, %s21
      %s24 = sphi 0, %s22
      %s25 = sphi 0, %s23
      %s37 = sphi 0, %s39
      %s40 = sphi 0, %s37
      %s41 = sphi 0, %s40
      %s57 = sphi 0, %s41
      %s61 = sphi 0, %s61
      %s63 = sphi 0, %s61
      %s64 = sphi 0, %s63
      %s78 = sphi 0, %s64
      %s84 = sphi 0, %s86
      %s87 = sphi 0, %s84
      %s88 = sphi 0, %s87
      %s104 = sphi 0, %s88
      %s108 = sphi 0, %s108
      %s110 = sphi 0, %s108
      %s111 = sphi 0, %s110
      %s125 = sphi 0, %s111
      %s131 = sphi 0, %s133
      %s134 = sphi 0, %s131
      %s135 = sphi 0, %s134
      %s151 = sphi 0, %s135
    $region4: #{tpu_custom_call.1} parent=1 // loop_header_branch
      %16 = sbr.rel (%p14) target = $region8
    $region5: #{tpu_custom_call.1} parent=1 // loop_body
      %s18 = ssub.s32 %s13, 1
      %s19 = ssub.s32 %s13, 2
      %s26 = sadd.s32 1, %s21
      %p27 = scmp.ge.s32.totalorder %s26, 1
      %s28 = scalar_select %p27, 0, %s26
      %s29 = sadd.s32 1, %s20
      %s30 = scalar_select %p27, %s29, %s20
      %p31 = scmp.ge.s32.totalorder %s30, 2
      %s32 = scalar_select %p31, 0, %s30
      %s33 = ssub.s32 %s20, %s32
      %s34 = ssub.s32 %s21, %s28
      %s35 = sor.u32 %s33, %s34
      %p36 = scmp.eq.s32.totalorder %s35, 0
      %s38 = sadd.s32 %s37, 1
      %s39 = scalar_select %p36, %s37, %s38
      %p42 = pneg %p36
      %p43 = scmp.eq.s32.totalorder %s13, 1
      %p44 = por %p42, %p43
      %p45 = scmp.ne.s32.totalorder %s37, %s40
      %p46 = scmp.eq.s32.totalorder %s13, 0
      %p47 = por %p45, %p46
      %p48 = scmp.ne.s32.totalorder %s37, %s40
      %p49 = scmp.eq.s32.totalorder %s18, 1
      %p50 = por %p48, %p49
      %p51 = scmp.ne.s32.totalorder %s40, %s41
      %p52 = scmp.eq.s32.totalorder %s18, 0
      %p53 = por %p51, %p52
      %p54 = scmp.ne.s32.totalorder %s40, %s41
      %p55 = scmp.eq.s32.totalorder %s19, 1
      %p56 = por %p54, %p55
      %p58 = scmp.ne.s32.totalorder %s41, %s57
      %p59 = scmp.eq.s32.totalorder %s19, 0
      %p60 = por %p58, %p59
      %s62 = sadd.s32 %s61, 1
      %p65 = scmp.eq.s32.totalorder %s13, 1
      %p66 = scmp.ne.s32.totalorder %s61, %s63
      %p67 = scmp.eq.s32.totalorder %s13, 0
      %p68 = por %p66, %p67
      %p69 = scmp.ne.s32.totalorder %s61, %s63
      %p70 = scmp.eq.s32.totalorder %s18, 1
      %p71 = por %p69, %p70
      %p72 = scmp.ne.s32.totalorder %s63, %s64
      %p73 = scmp.eq.s32.totalorder %s18, 0
      %p74 = por %p72, %p73
      %p75 = scmp.ne.s32.totalorder %s63, %s64
      %p76 = scmp.eq.s32.totalorder %s19, 1
      %p77 = por %p75, %p76
      %p79 = scmp.ne.s32.totalorder %s64, %s78
      %p80 = scmp.eq.s32.totalorder %s19, 0
      %p81 = por %p79, %p80
      %s82 = ssub.s32 %s21, %s28
      %p83 = scmp.eq.s32.totalorder %s82, 0
      %s85 = sadd.s32 %s84, 1
      %s86 = scalar_select %p83, %s84, %s85
      %p89 = pneg %p83
      %p90 = scmp.eq.s32.totalorder %s13, 1
      %p91 = por %p89, %p90
      %p92 = scmp.ne.s32.totalorder %s84, %s87
      %p93 = scmp.eq.s32.totalorder %s13, 0
      %p94 = por %p92, %p93
      %p95 = scmp.ne.s32.totalorder %s84, %s87
      %p96 = scmp.eq.s32.totalorder %s18, 1
      %p97 = por %p95, %p96
      %p98 = scmp.ne.s32.totalorder %s87, %s88
      %p99 = scmp.eq.s32.totalorder %s18, 0
      %p100 = por %p98, %p99
      %p101 = scmp.ne.s32.totalorder %s87, %s88
      %p102 = scmp.eq.s32.totalorder %s19, 1
      %p103 = por %p101, %p102
      %p105 = scmp.ne.s32.totalorder %s88, %s104
      %p106 = scmp.eq.s32.totalorder %s19, 0
      %p107 = por %p105, %p106
      %s109 = sadd.s32 %s108, 1
      %p112 = scmp.eq.s32.totalorder %s13, 1
      %p113 = scmp.ne.s32.totalorder %s108, %s110
      %p114 = scmp.eq.s32.totalorder %s13, 0
      %p115 = por %p113, %p114
      %p116 = scmp.ne.s32.totalorder %s108, %s110
      %p117 = scmp.eq.s32.totalorder %s18, 1
      %p118 = por %p116, %p117
      %p119 = scmp.ne.s32.totalorder %s110, %s111
      %p120 = scmp.eq.s32.totalorder %s18, 0
      %p121 = por %p119, %p120
      %p122 = scmp.ne.s32.totalorder %s110, %s111
      %p123 = scmp.eq.s32.totalorder %s19, 1
      %p124 = por %p122, %p123
      %p126 = scmp.ne.s32.totalorder %s111, %s125
      %p127 = scmp.eq.s32.totalorder %s19, 0
      %p128 = por %p126, %p127
      %s129 = ssub.s32 %s20, %s32
      %p130 = scmp.eq.s32.totalorder %s129, 0
      %s132 = sadd.s32 %s131, 1
      %s133 = scalar_select %p130, %s131, %s132
      %p136 = pneg %p130
      %p137 = scmp.eq.s32.totalorder %s13, 1
      %p138 = por %p136, %p137
      %p139 = scmp.ne.s32.totalorder %s131, %s134
      %p140 = scmp.eq.s32.totalorder %s13, 0
      %p141 = por %p139, %p140
      %p142 = scmp.ne.s32.totalorder %s131, %s134
      %p143 = scmp.eq.s32.totalorder %s18, 1
      %p144 = por %p142, %p143
      %p145 = scmp.ne.s32.totalorder %s134, %s135
      %p146 = scmp.eq.s32.totalorder %s18, 0
      %p147 = por %p145, %p146
      %p148 = scmp.ne.s32.totalorder %s134, %s135
      %p149 = scmp.eq.s32.totalorder %s19, 1
      %p150 = por %p148, %p149
      %p152 = scmp.ne.s32.totalorder %s135, %s151
      %p153 = scmp.eq.s32.totalorder %s19, 0
      %p154 = por %p152, %p153
      %p155 = scmp.le.s32.totalorder 1, %s13
      %p156 = scmp.lt.s32.totalorder %s13, 3
      %p157 = pnand %p155, %p156
      %p158 = pneg %p157
      // Predicated region
      $region9: #{tpu_custom_call.1} parent=5 // pred_check
        _
      $region10: #{tpu_custom_call.1} parent=5 // pred_check_branch
        %160 = sbr.rel (%p157) target = $region12
      $region11: #{tpu_custom_call.1} parent=5 // pred_region
        %s161 = ssub.s32 %s13, 1
        // Predicated region
        $region13: #{tpu_custom_call.1} parent=11 // pred_check
          %p162 = pneg %p74
        $region14: #{tpu_custom_call.1} parent=11 // pred_check_branch
          %164 = sbr.rel (%p162) target = $region16
        $region15: #{tpu_custom_call.1} parent=11 // pred_region
          _
        $region16: #{tpu_custom_call.1} parent=11 // pred_fallthru
          _
        // Predicated region
        $region17: #{tpu_custom_call.1} parent=11 // pred_check
          %p165 = pneg %p100
        $region18: #{tpu_custom_call.1} parent=11 // pred_check_branch
          %167 = sbr.rel (%p165) target = $region20
        $region19: #{tpu_custom_call.1} parent=11 // pred_region
          %p168 = scmp.lt.s32.totalorder %s23, 0
          %s169 = scalar_select %p168, %s23, 0
          %s170 = smul.addr %s169, 4
          %s171 = scalar_lea.vmem %s2, %s170
        $region20: #{tpu_custom_call.1} parent=11 // pred_fallthru
          _
        // Predicated region
        $region21: #{tpu_custom_call.1} parent=11 // pred_check
          %p172 = pneg %p121
        $region22: #{tpu_custom_call.1} parent=11 // pred_check_branch
          %174 = sbr.rel (%p172) target = $region24
        $region23: #{tpu_custom_call.1} parent=11 // pred_region
          _
        $region24: #{tpu_custom_call.1} parent=11 // pred_fallthru
          _
      $region12: #{tpu_custom_call.1} parent=5 // pred_fallthru
        _
      %p175 = scmp.lt.s32.totalorder %s13, 2
      // Predicated region
      $region25: #{tpu_custom_call.1} parent=5 // pred_check
        %p176 = pneg %p175
      $region26: #{tpu_custom_call.1} parent=5 // pred_check_branch
        %178 = sbr.rel (%p176) target = $region28
      $region27: #{tpu_custom_call.1} parent=5 // pred_region
        // Predicated region
        $region29: #{tpu_custom_call.1} parent=27 // pred_check
          %p179 = pneg %p47
        $region30: #{tpu_custom_call.1} parent=27 // pred_check_branch
          %181 = sbr.rel (%p179) target = $region32
        $region31: #{tpu_custom_call.1} parent=27 // pred_region
          %p182 = scmp.lt.s32.totalorder %s20, 1
          %s183 = scalar_select %p182, %s20, 1
          %p184 = scmp.lt.s32.totalorder %s21, 0
          %s185 = scalar_select %p184, %s21, 0
          %s186 = smul.addr %s185, 2
          %s187 = smul.addr %s183, 2
          %s188 = sadd.s32 %s186, %s187
          %s189 = smul.addr %s188, 4
          %s190 = scalar_lea.vmem %s0, %s189
        $region32: #{tpu_custom_call.1} parent=27 // pred_fallthru
          _
      $region28: #{tpu_custom_call.1} parent=5 // pred_fallthru
        _
      %p191 = scmp.le.s32.totalorder 1, %s13
      %p192 = scmp.lt.s32.totalorder %s13, 3
      %p193 = pnand %p191, %p192
      %p194 = pneg %p193
      // Predicated region
      $region33: #{tpu_custom_call.1} parent=5 // pred_check
        _
      $region34: #{tpu_custom_call.1} parent=5 // pred_check_branch
        %196 = sbr.rel (%p193) target = $region36
      $region35: #{tpu_custom_call.1} parent=5 // pred_region
        %s197 = ssub.s32 %s13, 1
        %p198 = scmp.lt.s32.totalorder %s22, 1
        %s199 = scalar_select %p198, %s22, 1
        %p200 = scmp.lt.s32.totalorder %s23, 0
        %s201 = scalar_select %p200, %s23, 0
        %s202 = smul.addr %s201, 2
        %s203 = smul.addr %s199, 2
        %s204 = sadd.s32 %s202, %s203
        %s205 = smul.addr %s204, 4
        %s206 = scalar_lea.vmem %s0, %s205
        %p207 = pneg %p53
        %p208 = pneg %p50
        %p209 = pneg %p74
        %p210 = pneg %p71
        %p211 = scmp.lt.s32.totalorder %s23, 0
        %s212 = scalar_select %p211, %s23, 0
        %s213 = smul.addr %s212, 4
        %s214 = scalar_lea.vmem %s2, %s213
        %p215 = pneg %p100
        %p216 = pneg %p97
        %p217 = pneg %p121
        %p218 = pneg %p118
        %p219 = pneg %p147
        %p220 = pneg %p144
        %s221 = sand.u32 %s134, 1
        %s222 = scalar_lea.sflag [#allocation4], %s221
        %s223 = sand.u32 %s134, 1
        %s224 = smul.addr %s223, 16
        %s225 = scalar_lea.vmem [#allocation3], %s224
        %p226 = scmp.lt.s32.totalorder %s22, 1
        %s227 = scalar_select %p226, %s22, 1
        %p228 = scmp.lt.s32.totalorder %s23, 0
        %s229 = scalar_select %p228, %s23, 0
        %s230 = smul.addr %s229, 2
        %s231 = smul.addr %s227, 2
        %s232 = sadd.s32 %s230, %s231
        %s233 = smul.addr %s232, 4
        %s234 = scalar_lea.vmem %s0, %s233
        %p235 = scmp.lt.s32.totalorder %s23, 0
        %s236 = scalar_select %p235, %s23, 0
        %s237 = smul.addr %s236, 4
        %s238 = scalar_lea.vmem %s2, %s237
        %p239 = scmp.eq.s32.totalorder %s23, 0
        // Predicated region
        $region37: #{tpu_custom_call.1} parent=35 // pred_check
          %p240 = pneg %p239
        $region38: #{tpu_custom_call.1} parent=35 // pred_check_branch
          %242 = sbr.rel (%p240) target = $region40
        $region39: #{tpu_custom_call.1} parent=35 // pred_region
          %243 = vst [vmem:[#allocation2] sm:$0xff] 0.0
          %244 = vst [vmem:[#allocation2 + $0x8] sm:$0xff] 0.0
        $region40: #{tpu_custom_call.1} parent=35 // pred_fallthru
          _
        %v245 = vld [vmem:[%s234] sm:$0xff]
        %v246 = vld [vmem:[%s1] sm:$0xff]
        %v247 = vld [vmem:[%s1 + $0x8] sm:$0xff]
        %v248 = vld [vmem:[%s1 + $0x10] sm:$0xff]
        %v249 = vld [vmem:[%s1 + $0x18] sm:$0xff]
        %v250 = vld [vmem:[%s1 + $0x20] sm:$0xff]
        %v251 = vld [vmem:[%s1 + $0x28] sm:$0xff]
        %v252 = vld [vmem:[%s1 + $0x30] sm:$0xff]
        %v253 = vld [vmem:[%s1 + $0x38] sm:$0xff]
        %v254 = vld [vmem:[%s1 + $0x40] sm:$0xff]
        %v255 = vld [vmem:[%s1 + $0x48] sm:$0xff]
        %v256 = vld [vmem:[%s1 + $0x50] sm:$0xff]
        %v257 = vld [vmem:[%s1 + $0x58] sm:$0xff]
        %v258 = vld [vmem:[%s1 + $0x60] sm:$0xff]
        %v259 = vld [vmem:[%s1 + $0x68] sm:$0xff]
        %v260 = vld [vmem:[%s1 + $0x70] sm:$0xff]
        %v261 = vld [vmem:[%s1 + $0x78] sm:$0xff]
        %v262 = vld [vmem:[%s1 + $0x80] sm:$0xff]
        %v263 = vld [vmem:[%s1 + $0x88] sm:$0xff]
        %v264 = vld [vmem:[%s1 + $0x90] sm:$0xff]
        %v265 = vld [vmem:[%s1 + $0x98] sm:$0xff]
        %v266 = vld [vmem:[%s1 + $0xa0] sm:$0xff]
        %v267 = vld [vmem:[%s1 + $0xa8] sm:$0xff]
        %v268 = vld [vmem:[%s1 + $0xb0] sm:$0xff]
        %v269 = vld [vmem:[%s1 + $0xb8] sm:$0xff]
        %v270 = vld [vmem:[%s1 + $0xc0] sm:$0xff]
        %v271 = vld [vmem:[%s1 + $0xc8] sm:$0xff]
        %v272 = vld [vmem:[%s1 + $0xd0] sm:$0xff]
        %v273 = vld [vmem:[%s1 + $0xd8] sm:$0xff]
        %v274 = vld [vmem:[%s1 + $0xe0] sm:$0xff]
        %v275 = vld [vmem:[%s1 + $0xe8] sm:$0xff]
        %v276 = vld [vmem:[%s1 + $0xf0] sm:$0xff]
        %v277 = vld [vmem:[%s1 + $0xf8] sm:$0xff]
        %279 = vst [vmem:[#allocation1] ss:$2 sm:$0xff] %v245
        %v280 = vld.sshfl [vmem:[#allocation1] sm:$0xff pattern:$0x75316420]
        %v281 = vld.sshfl [vmem:[#allocation1 + $0x8] sm:$0xff pattern:$0x75316420]
        %284 = vmatpush.msra.mxu0 %v261
        %285 = vmatpush.msra.mxu0 %v260
        %286 = vmatpush.msra.mxu0 %v259
        %287 = vmatpush.msra.mxu0 %v258
        %288 = vmatpush.msra.mxu0 %v257
        %289 = vmatpush.msra.mxu0 %v256
        %290 = vmatpush.msra.mxu0 %v255
        %291 = vmatpush.msra.mxu0 %v254
        %292 = vmatpush.msra.mxu0 %v253
        %293 = vmatpush.msra.mxu0 %v252
        %294 = vmatpush.msra.mxu0 %v251
        %295 = vmatpush.msra.mxu0 %v250
        %296 = vmatpush.msra.mxu0 %v249
        %297 = vmatpush.msra.mxu0 %v248
        %298 = vmatpush.msra.mxu0 %v247
        %299 = vmatpush.msra.mxu0 %v246
        %300 = vmatmul.f32.gmra.mxu0 %v280
        %v301 = vpop.f32.mrf.mxu0
        %v302 = vadd.f32 0.0, %v301
        %303 = vdwg.mxu0
        %304 = vmatpush.msra.mxu0 %v277
        %305 = vmatpush.msra.mxu0 %v276
        %306 = vmatpush.msra.mxu0 %v275
        %307 = vmatpush.msra.mxu0 %v274
        %308 = vmatpush.msra.mxu0 %v273
        %309 = vmatpush.msra.mxu0 %v272
        %310 = vmatpush.msra.mxu0 %v271
        %311 = vmatpush.msra.mxu0 %v270
        %312 = vmatpush.msra.mxu0 %v269
        %313 = vmatpush.msra.mxu0 %v268
        %314 = vmatpush.msra.mxu0 %v267
        %315 = vmatpush.msra.mxu0 %v266
        %316 = vmatpush.msra.mxu0 %v265
        %317 = vmatpush.msra.mxu0 %v264
        %318 = vmatpush.msra.mxu0 %v263
        %319 = vmatpush.msra.mxu0 %v262
        %320 = vmatmul.f32.gmra.mxu0 %v281
        %v321 = vpop.f32.mrf.mxu0
        %v322 = vadd.f32 %v302, %v321
        %323 = vdwg.mxu0
        %v324 = vld [vmem:[#allocation2] sm:$0xff]
        %v325 = vld [vmem:[#allocation2 + $0x8] sm:$0xff]
        %v326 = vld [vmem:[%s238] sm:$0xf]
        %327 = vxpose.xlu0.b32.start [1/16] %v322, 128
        %328 = vxpose.xlu0.b32.cont [2/16] 0.0, 128
        %329 = vxpose.xlu0.b32.cont [3/16] 0.0, 128
        %330 = vxpose.xlu0.b32.cont [4/16] 0.0, 128
        %331 = vxpose.xlu0.b32.cont [5/16] 0.0, 128
        %332 = vxpose.xlu0.b32.cont [6/16] 0.0, 128
        %333 = vxpose.xlu0.b32.cont [7/16] 0.0, 128
        %334 = vxpose.xlu0.b32.cont [8/16] 0.0, 128
        %335 = vxpose.xlu0.b32.cont [9/16] 0.0, 128
        %336 = vxpose.xlu0.b32.cont [10/16] 0.0, 128
        %337 = vxpose.xlu0.b32.cont [11/16] 0.0, 128
        %338 = vxpose.xlu0.b32.cont [12/16] 0.0, 128
        %339 = vxpose.xlu0.b32.cont [13/16] 0.0, 128
        %340 = vxpose.xlu0.b32.cont [14/16] 0.0, 128
        %341 = vxpose.xlu0.b32.cont [15/16] 0.0, 128
        %342 = vxpose.xlu0.b32.end [16/16] 0.0, 128
        %v343 = vpop.trf.xlu0
        %v344 = vpop.trf.xlu0
        %v345 = vpop.trf.xlu0
        %v346 = vpop.trf.xlu0
        %v347 = vpop.trf.xlu0
        %v348 = vpop.trf.xlu0
        %v349 = vpop.trf.xlu0
        %v350 = vpop.trf.xlu0
        %v351 = vpop.trf.xlu0
        %v352 = vpop.trf.xlu0
        %v353 = vpop.trf.xlu0
        %v354 = vpop.trf.xlu0
        %v355 = vpop.trf.xlu0
        %v356 = vpop.trf.xlu0
        %v357 = vpop.trf.xlu0
        %v358 = vpop.trf.xlu0
        %vm359 = vcmask 31744
        %v361 = vsel %vm359, %v343, 0
        %v364 = vsel %vm359, %v344, 0
        %vm366 = vcmask 1043456
        %v368 = vsel %vm366, %v326, 0
        %370 = vmatpush.msra.mxu0 0.0
        %371 = vmatpush.msra.mxu0 0.0
        %372 = vmatpush.msra.mxu0 0.0
        %373 = vmatpush.msra.mxu0 0.0
        %374 = vmatpush.msra.mxu0 0.0
        %375 = vmatpush.msra.mxu0 0.0
        %376 = vmatpush.msra.mxu0 0.0
        %377 = vmatpush.msra.mxu0 0.0
        %378 = vmatpush.msra.mxu0 0.0
        %379 = vmatpush.msra.mxu0 0.0
        %380 = vmatpush.msra.mxu0 0.0
        %381 = vmatpush.msra.mxu0 0.0
        %382 = vmatpush.msra.mxu0 0.0
        %383 = vmatpush.msra.mxu0 0.0
        %384 = vmatpush.msra.mxu0 0.0
        %385 = vmatpush.msra.mxu0 %v368
        %386 = vmatmul.f32.gmra.mxu0 %v361
        %v387 = vpop.f32.mrf.mxu0
        %v388 = vadd.f32 0.0, %v387
        %389 = vmatmul.f32.gmra.mxu0 %v364
        %v390 = vpop.f32.mrf.mxu0
        %v391 = vadd.f32 0.0, %v390
        %392 = vdwg.mxu0
        %v393 = vadd.f32 %v324, %v388
        %v394 = vadd.f32 %v325, %v391
        %395 = vst [vmem:[#allocation2] sm:$0xff] %v393
        %396 = vst [vmem:[#allocation2 + $0x8] sm:$0xff] %v394
        // Predicated region
        $region41: #{tpu_custom_call.1} parent=35 // pred_check
          %p397 = pneg %p239
        $region42: #{tpu_custom_call.1} parent=35 // pred_check_branch
          %399 = sbr.rel (%p397) target = $region44
        $region43: #{tpu_custom_call.1} parent=35 // pred_region
          %v400 = vld [vmem:[#allocation2] sm:$0xff]
          %v401 = vld [vmem:[#allocation2 + $0x8] sm:$0xff]
          %v402 = vld [vmem:[%s3] sm:$0x1]
          %v404 = vperm.slane %v402, 0
          %v406 = vadd.f32 %v400, %v404
          %v407 = vadd.f32 %v401, %v404
          %v408 = vmax.f32 %v406, 0.0
          %v409 = vmax.f32 %v407, 0.0
          %410 = vst [vmem:[%s225] sm:$0xff] %v408
          %411 = vst [vmem:[%s225 + $0x8] sm:$0xff] %v409
        $region44: #{tpu_custom_call.1} parent=35 // pred_fallthru
          _
        %s412 = sand.u32 %s134, 1
        %s413 = scalar_lea.sflag [#allocation4], %s412
        %s414 = sand.u32 %s134, 1
        %s415 = smul.addr %s414, 16
        %s416 = scalar_lea.vmem [#allocation3], %s415
        // Predicated region
        $region45: #{tpu_custom_call.1} parent=35 // pred_check
          %p417 = pneg %p144
        $region46: #{tpu_custom_call.1} parent=35 // pred_check_branch
          %419 = sbr.rel (%p417) target = $region48
        $region47: #{tpu_custom_call.1} parent=35 // pred_region
          %421 = vsyncadd %s413, 0
          %s422 = smul.addr %s22, 2
          %s423 = smul.addr %s422, 8
          %s424 = scalar_lea.hbm %s4, %s423
          %s425 = sshll.u32 %s416, 4
          %s426 = int_to_ptr.vmem [resolvable:$true] %s425
          %s427 = sshll.u32 %s424, 4
          %s428 = int_to_ptr.hbm [resolvable:$true] %s427
          %433 = dma.vmem_to_hbm [thread:$0]  %s426, 256, %s428, %s413, 128, 128, 8
        $region48: #{tpu_custom_call.1} parent=35 // pred_fallthru
          _
      $region36: #{tpu_custom_call.1} parent=5 // pred_fallthru
        _
      %p434 = scmp.le.s32.totalorder 2, %s13
      // Predicated region
      $region49: #{tpu_custom_call.1} parent=5 // pred_check
        %p435 = pneg %p434
      $region50: #{tpu_custom_call.1} parent=5 // pred_check_branch
        %437 = sbr.rel (%p435) target = $region52
      $region51: #{tpu_custom_call.1} parent=5 // pred_region
        %s438 = ssub.s32 %s13, 2
        // Predicated region
        $region53: #{tpu_custom_call.1} parent=51 // pred_check
          %p439 = pneg %p150
        $region54: #{tpu_custom_call.1} parent=51 // pred_check_branch
          %441 = sbr.rel (%p439) target = $region56
        $region55: #{tpu_custom_call.1} parent=51 // pred_region
          %s442 = sand.u32 %s135, 1
          %s443 = scalar_lea.sflag [#allocation4], %s442
          %s444 = sand.u32 %s135, 1
          %s445 = smul.addr %s444, 16
          %s446 = scalar_lea.vmem [#allocation3], %s445
          %448 = dma.done %s443, 256
        $region56: #{tpu_custom_call.1} parent=51 // pred_fallthru
          _
      $region52: #{tpu_custom_call.1} parent=5 // pred_fallthru
        _
    $region6: #{tpu_custom_call.1} parent=1 // loop_footer
      %s17 = sadd.s32 1, %s13
    $region7: #{tpu_custom_call.1} parent=1 // loop_footer_branch
      %12 = sbr.rel target = $region3
    $region8: #{tpu_custom_call.1} parent=1 // loop_exit
      _
    %449 = vsyncpa [#allocation4], 1
    %s450 = scalar_lea.sflag [#allocation4], 1
    %451 = vsyncpa %s450, 1

</llo_original>
